<compile_context>
chip_gen: v7x
topology: tpu7x:2x2x1
jax: 0.10.0
libtpu: 0.0.40
codegen_flags: <defaults>
</compile_context>

<pallas_src>
import functools

import jax
import jax.numpy as jnp
from jax.experimental import pallas as pl
from jax.experimental.pallas import tpu as pltpu

LANE = 128      # vreg lane width
SUBLANE = 8     # vreg sublane count


def _round_up(n, m):
    return ((n + m - 1) // m) * m


def _pad2d(a, rows, cols):
    pr, pc = rows - a.shape[0], cols - a.shape[1]
    if pr == 0 and pc == 0:
        return a
    return jnp.pad(a, ((0, pr), (0, pc)))


# ---------- pass 1: map1 -> relu6 -> map2 ; accumulate BN batch statistics ----------

def _stats_kernel(x_ref, w1_ref, b1_ref, w2_ref,
                  h2_ref, sum_ref, sumsq_ref, *, true_b, tile_b):
    i = pl.program_id(0)

    @pl.when(i == 0)
    def _():
        sum_ref[...] = jnp.zeros_like(sum_ref)
        sumsq_ref[...] = jnp.zeros_like(sumsq_ref)

    x = x_ref[...].astype(w1_ref.dtype)
    h1 = jnp.dot(x, w1_ref[...], preferred_element_type=jnp.float32) + b1_ref[...]
    h1 = jnp.clip(h1, 0.0, 6.0)                                   # relu6
    # NOTE: map2's bias is mathematically cancelled by the training-mode
    # BatchNorm mean subtraction, so it is dropped (no b2 operand / DMA / add).
    h2 = jnp.dot(h1.astype(w2_ref.dtype), w2_ref[...],
                 preferred_element_type=jnp.float32)
    h2_ref[...] = h2

    # Mask batch-padding rows: zero-padded x rows still yield relu6(b1) @ w2 != 0,
    # and BN stats must be taken over the *true* batch only.
    row = i * tile_b + jax.lax.broadcasted_iota(jnp.int32, (tile_b, 1), 0)
    h2m = jnp.where(row < true_b, h2, 0.0)
    sum_ref[...] += jnp.sum(h2m, axis=0, keepdims=True)
    sumsq_ref[...] += jnp.sum(h2m * h2m, axis=0, keepdims=True)


# ---------- pass 2: BN normalize -> relu6 -> map3 -> sigmoid -------------------------

def _apply_kernel(h2_ref, sum_ref, sumsq_ref, gamma_ref, beta_ref,
                  w3_ref, b3_ref, o_ref, *, inv_b):
    mean = sum_ref[...] * inv_b
    var = sumsq_ref[...] * inv_b - mean * mean                    # biased variance
    scale = gamma_ref[...] * jax.lax.rsqrt(var + 1e-5)            # fold gamma into scale
    shift = beta_ref[...] - mean * scale
    h = jnp.clip(h2_ref[...] * scale + shift, 0.0, 6.0)           # BN + relu6 (one FMA)
    y = jnp.dot(h.astype(w3_ref.dtype), w3_ref[...],
                preferred_element_type=jnp.float32) + b3_ref[...]
    o_ref[...] = jax.nn.sigmoid(y)


# ---------- wrapper ------------------------------------------------------------------

def discriminator_forward(x, params, *, tile_b=512, vmem_limit_bytes=32 * 1024 * 1024):
    """x: [B, input_size] float32. params: dict from init_params."""
    B, In = x.shape
    H = params["w1"].shape[1]
    Out = params["w3"].shape[1]

    In_p = _round_up(In, LANE)
    H_p = _round_up(H, LANE)
    Out_p = _round_up(Out, LANE)

    # Batch tile: multiple of the 8-row sublane; default 512 rows stays well
    # inside v7x's 64 MiB physical / 32 MiB scoped VMEM even double-buffered.
    tile_b = _round_up(min(tile_b, _round_up(B, SUBLANE)), SUBLANE)
    B_p = _round_up(B, tile_b)
    nb = B_p // tile_b

    # Zero-pad every feature dim to 128 lanes: MXU occupancy + unmasked lane-dense
    # stores (incl. the otherwise 8-wide output). Padding is mathematically inert
    # (padded weight/bias entries are zero), and is sliced off at the end.
    x_p = _pad2d(x, B_p, In_p)
    w1 = _pad2d(params["w1"], In_p, H_p)
    b1 = _pad2d(params["b1"], 1, H_p)
    w2 = _pad2d(params["w2"], H_p, H_p)
    gamma = _pad2d(params["gamma"], 1, H_p)
    beta = _pad2d(params["beta"], 1, H_p)
    w3 = _pad2d(params["w3"], H_p, Out_p)
    b3 = _pad2d(params["b3"], 1, Out_p)

    # ---- pass 1: h2 tiles + per-feature (sum, sum-of-squares) accumulators ----
    flops1 = 2 * B_p * (In_p * H_p + H_p * H_p)
    bytes1 = (4 * B_p * (In_p + 2 * H_p)
              + w1.size * w1.dtype.itemsize + w2.size * w2.dtype.itemsize)
    h2, s1, s2 = pl.pallas_call(
        functools.partial(_stats_kernel, true_b=B, tile_b=tile_b),
        grid=(nb,),
        in_specs=[
            pl.BlockSpec((tile_b, In_p), lambda i: (i, 0)),   # x tile
            pl.BlockSpec((In_p, H_p), lambda i: (0, 0)),      # w1 (VMEM-resident)
            pl.BlockSpec((1, H_p), lambda i: (0, 0)),         # b1
            pl.BlockSpec((H_p, H_p), lambda i: (0, 0)),       # w2
        ],
        out_specs=(
            pl.BlockSpec((tile_b, H_p), lambda i: (i, 0)),    # h2 tile
            pl.BlockSpec((1, H_p), lambda i: (0, 0)),         # sum   (accumulator)
            pl.BlockSpec((1, H_p), lambda i: (0, 0)),         # sumsq (accumulator)
        ),
        out_shape=(
            jax.ShapeDtypeStruct((B_p, H_p), jnp.float32),
            jax.ShapeDtypeStruct((1, H_p), jnp.float32),
            jax.ShapeDtypeStruct((1, H_p), jnp.float32),
        ),
        compiler_params=pltpu.CompilerParams(
            dimension_semantics=("arbitrary",),   # BN stats reduce over batch tiles
            vmem_limit_bytes=vmem_limit_bytes),
        cost_estimate=pl.CostEstimate(
            flops=flops1, transcendentals=0, bytes_accessed=bytes1),
    )(x_p, w1, b1, w2)

    # ---- pass 2: normalize + relu6 + map3 + sigmoid (independent batch tiles) ----
    flops2 = 2 * B_p * H_p * Out_p + 8 * B_p * H_p
    bytes2 = 4 * B_p * (H_p + Out_p) + w3.size * w3.dtype.itemsize
    out_p = pl.pallas_call(
        functools.partial(_apply_kernel, inv_b=1.0 / B),
        grid=(nb,),
        in_specs=[
            pl.BlockSpec((tile_b, H_p), lambda i: (i, 0)),    # h2 tile
            pl.BlockSpec((1, H_p), lambda i: (0, 0)),         # sum
            pl.BlockSpec((1, H_p), lambda i: (0, 0)),         # sumsq
            pl.BlockSpec((1, H_p), lambda i: (0, 0)),         # gamma
            pl.BlockSpec((1, H_p), lambda i: (0, 0)),         # beta
            pl.BlockSpec((H_p, Out_p), lambda i: (0, 0)),     # w3
            pl.BlockSpec((1, Out_p), lambda i: (0, 0)),       # b3
        ],
        out_specs=pl.BlockSpec((tile_b, Out_p), lambda i: (i, 0)),
        out_shape=jax.ShapeDtypeStruct((B_p, Out_p), jnp.float32),
        compiler_params=pltpu.CompilerParams(
            dimension_semantics=("parallel",),    # independent tiles -> megacore
            vmem_limit_bytes=vmem_limit_bytes),
        cost_estimate=pl.CostEstimate(
            flops=flops2, transcendentals=B_p * Out_p, bytes_accessed=bytes2),
    )(h2, s1, s2, gamma, beta, w3, b3)

    return out_p[:B, :Out]


# ---------- params & pure-JAX reference ----------------------------------------------

def init_params(key, input_size, hidden_size, output_size, weight_dtype=jnp.float32):
    """PyTorch-Linear-style uniform init. Weights stored [in_features, out_features].
    weight_dtype=jnp.bfloat16 halves weight VMEM/HBM traffic on v6e/v7x."""
    ks = jax.random.split(key, 6)

    def linear(kw, kb, fan_in, fan_out):
        bound = 1.0 / jnp.sqrt(fan_in)
        w = jax.random.uniform(kw, (fan_in, fan_out), jnp.float32,
                               -bound, bound).astype(weight_dtype)
        b = jax.random.uniform(kb, (1, fan_out), jnp.float32, -bound, bound)
        return w, b

    w1, b1 = linear(ks[0], ks[1], input_size, hidden_size)
    w2, b2 = linear(ks[2], ks[3], hidden_size, hidden_size)
    w3, b3 = linear(ks[4], ks[5], hidden_size, output_size)
    gamma = jnp.ones((1, hidden_size), jnp.float32)   # BatchNorm1d.weight init
    beta = jnp.zeros((1, hidden_size), jnp.float32)   # BatchNorm1d.bias init
    # b2 is kept only for parity with the PyTorch module; the kernel never uses it
    # because training-mode BatchNorm cancels any per-feature pre-BN constant.
    return dict(w1=w1, b1=b1, w2=w2, b2=b2, gamma=gamma, beta=beta, w3=w3, b3=b3)


def reference_forward(x, p):
    """Pure-JAX reference mirroring the PyTorch forward (training-mode BN, with b2)."""
    h = jnp.clip(x @ p["w1"].astype(jnp.float32) + p["b1"], 0.0, 6.0)
    h = h @ p["w2"].astype(jnp.float32) + p["b2"]
    mean = jnp.mean(h, axis=0, keepdims=True)
    var = jnp.mean((h - mean) ** 2, axis=0, keepdims=True)
    h = jnp.clip((h - mean) / jnp.sqrt(var + 1e-5) * p["gamma"] + p["beta"], 0.0, 6.0)
    return jax.nn.sigmoid(h @ p["w3"].astype(jnp.float32) + p["b3"])


if __name__ == "__main__":
    input_size, hidden_size, output_size = 16, 32, 8

    key = jax.random.PRNGKey(0)
    kx1, kx2, kp = jax.random.split(key, 3)
    params = init_params(kp, input_size, hidden_size, output_size)

    # Small batch (single tile).
    x_small = jax.random.normal(kx1, (8, input_size), jnp.float32)
    out_small = jax.block_until_ready(discriminator_forward(x_small, params))
    ref_small = reference_forward(x_small, params)
    assert out_small.shape == (8, output_size)
    assert jnp.allclose(out_small, ref_small, atol=2e-5, rtol=2e-5), "small-batch mismatch"

    # Larger, non-tile-multiple batch: exercises batch tiling, the two-pass
    # BatchNorm accumulator, and padded-row masking.
    x_big = jax.random.normal(kx2, (600, input_size), jnp.float32)
    out_big = jax.block_until_ready(discriminator_forward(x_big, params, tile_b=256))
    ref_big = reference_forward(x_big, params)
    assert out_big.shape == (600, output_size)
    assert jnp.allclose(out_big, ref_big, atol=2e-5, rtol=2e-5), "big-batch mismatch"

    # TODO(synk): BatchNorm1d's running_mean/running_var side-effect update is a
    # training-time bookkeeping op and does not affect this forward's output.
    print("KERNEL_OK")
</pallas_src>

<mosaic_0001>
module attributes {stable_mosaic.version = 11 : i64} {
  func.func @_stats_kernel(%arg0: i32, %arg1: memref<8x128xf32, #tpu.memory_space<vmem>>, %arg2: memref<128x128xf32, #tpu.memory_space<vmem>>, %arg3: memref<1x128xf32, #tpu.memory_space<vmem>>, %arg4: memref<128x128xf32, #tpu.memory_space<vmem>>, %arg5: memref<8x128xf32, #tpu.memory_space<vmem>>, %arg6: memref<1x128xf32, #tpu.memory_space<vmem>>, %arg7: memref<1x128xf32, #tpu.memory_space<vmem>>) attributes {dimension_semantics = [#tpu.dimension_semantics<arbitrary>], iteration_bounds = array<i64: 1>, scalar_prefetch = 0 : i64, scratch_operands = 0 : i64, tpu.core_type = #tpu.core_type<tc>, window_params = [{transform_indices = @transform_0, window_bounds = array<i64: 8, 128>}, {pipeline_mode = #tpu.pipeline_mode<synchronous>, transform_indices = @transform_1, window_bounds = array<i64: 128, 128>}, {pipeline_mode = #tpu.pipeline_mode<synchronous>, transform_indices = @transform_2, window_bounds = array<i64: 1, 128>}, {pipeline_mode = #tpu.pipeline_mode<synchronous>, transform_indices = @transform_3, window_bounds = array<i64: 128, 128>}, {transform_indices = @transform_4, window_bounds = array<i64: 8, 128>}, {pipeline_mode = #tpu.pipeline_mode<synchronous>, transform_indices = @transform_5, window_bounds = array<i64: 1, 128>}, {pipeline_mode = #tpu.pipeline_mode<synchronous>, transform_indices = @transform_6, window_bounds = array<i64: 1, 128>}]} {
    %c0_i32 = arith.constant 0 : i32
    %0 = arith.cmpi eq, %arg0, %c0_i32 : i32
    %1 = arith.extui %0 : i1 to i32
    %c0_i32_0 = arith.constant 0 : i32
    %2 = arith.cmpi ne, %1, %c0_i32_0 : i32
    scf.if %2 {
      %cst_25 = arith.constant 0.000000e+00 : f32
      %37 = vector.broadcast %cst_25 : f32 to vector<1x128xf32>
      %c0_26 = arith.constant 0 : index
      %c0_27 = arith.constant 0 : index
      %38 = vector.load %arg6[%c0_26, %c0_27] : memref<1x128xf32, #tpu.memory_space<vmem>>, vector<1x128xf32>
      tpu.vector_store %arg6[%c0_26, %c0_27], %37 {strides = array<i32>} : memref<1x128xf32, #tpu.memory_space<vmem>>, vector<1x128xf32>,
      %cst_28 = arith.constant 0.000000e+00 : f32
      %39 = vector.broadcast %cst_28 : f32 to vector<1x128xf32>
      %c0_29 = arith.constant 0 : index
      %c0_30 = arith.constant 0 : index
      %40 = vector.load %arg7[%c0_29, %c0_30] : memref<1x128xf32, #tpu.memory_space<vmem>>, vector<1x128xf32>
      tpu.vector_store %arg7[%c0_29, %c0_30], %39 {strides = array<i32>} : memref<1x128xf32, #tpu.memory_space<vmem>>, vector<1x128xf32>,
    } else {
    }
    %c0 = arith.constant 0 : index
    %c0_1 = arith.constant 0 : index
    %3 = vector.load %arg1[%c0, %c0_1] : memref<8x128xf32, #tpu.memory_space<vmem>>, vector<8x128xf32>
    %c0_2 = arith.constant 0 : index
    %c0_3 = arith.constant 0 : index
    %4 = vector.load %arg2[%c0_2, %c0_3] : memref<128x128xf32, #tpu.memory_space<vmem>>, vector<128x128xf32>
    %cst = arith.constant dense<0.000000e+00> : vector<8x128xf32>
    %5 = tpu.matmul %3, %4, %cst {dimension_numbers = #tpu.dot_dimension_numbers<[1], [0], [0], [1], [0, 0, 1, 1], [], []>} : vector<8x128xf32>, vector<128x128xf32>, vector<8x128xf32> -> vector<8x128xf32>
    %c0_4 = arith.constant 0 : index
    %c0_5 = arith.constant 0 : index
    %6 = vector.load %arg3[%c0_4, %c0_5] : memref<1x128xf32, #tpu.memory_space<vmem>>, vector<1x128xf32>
    %7 = vector.broadcast %6 : vector<1x128xf32> to vector<8x128xf32>
    %8 = arith.addf %5, %7 : vector<8x128xf32>
    %cst_6 = arith.constant 0.000000e+00 : f32
    %cst_7 = arith.constant 6.000000e+00 : f32
    %9 = vector.broadcast %cst_6 : f32 to vector<8x128xf32>
    %10 = arith.maximumf %9, %8 : vector<8x128xf32>
    %11 = vector.broadcast %cst_7 : f32 to vector<8x128xf32>
    %12 = arith.minimumf %11, %10 : vector<8x128xf32>
    %c0_8 = arith.constant 0 : index
    %c0_9 = arith.constant 0 : index
    %13 = vector.load %arg4[%c0_8, %c0_9] : memref<128x128xf32, #tpu.memory_space<vmem>>, vector<128x128xf32>
    %cst_10 = arith.constant dense<0.000000e+00> : vector<8x128xf32>
    %14 = tpu.matmul %12, %13, %cst_10 {dimension_numbers = #tpu.dot_dimension_numbers<[1], [0], [0], [1], [0, 0, 1, 1], [], []>} : vector<8x128xf32>, vector<128x128xf32>, vector<8x128xf32> -> vector<8x128xf32>
    %c0_11 = arith.constant 0 : index
    %c0_12 = arith.constant 0 : index
    %15 = vector.load %arg5[%c0_11, %c0_12] : memref<8x128xf32, #tpu.memory_space<vmem>>, vector<8x128xf32>
    tpu.vector_store %arg5[%c0_11, %c0_12], %14 {strides = array<i32>} : memref<8x128xf32, #tpu.memory_space<vmem>>, vector<8x128xf32>,
    %c8_i32 = arith.constant 8 : i32
    %16 = arith.muli %arg0, %c8_i32 : i32
    %17 = tpu.iota {dimensions = array<i32: 0>} : vector<8x1xi32>
    %18 = vector.broadcast %16 : i32 to vector<8x1xi32>
    %19 = arith.addi %18, %17 : vector<8x1xi32>
    %c8_i32_13 = arith.constant 8 : i32
    %20 = vector.broadcast %c8_i32_13 : i32 to vector<8x1xi32>
    %21 = arith.cmpi slt, %19, %20 : vector<8x1xi32>
    %cst_14 = arith.constant 0.000000e+00 : f32
    %22 = vector.shape_cast %21 : vector<8x1xi1> to vector<8x1xi1>
    %23 = vector.broadcast %22 : vector<8x1xi1> to vector<8x128xi1>
    %24 = vector.broadcast %cst_14 : f32 to vector<8x128xf32>
    %25 = arith.select %23, %14, %24 : vector<8x128xi1>, vector<8x128xf32>
    %c0_15 = arith.constant 0 : index
    %c0_16 = arith.constant 0 : index
    %26 = vector.load %arg6[%c0_15, %c0_16] : memref<1x128xf32, #tpu.memory_space<vmem>>, vector<1x128xf32>
    %cst_17 = arith.constant dense<0.000000e+00> : vector<128xf32>
    %27 = vector.multi_reduction <add>, %25, %cst_17 [0] : vector<8x128xf32> to vector<128xf32>
    %28 = vector.shape_cast %27 : vector<128xf32> to vector<1x128xf32>
    %29 = arith.addf %26, %28 : vector<1x128xf32>
    %c0_18 = arith.constant 0 : index
    %c0_19 = arith.constant 0 : index
    %30 = vector.load %arg6[%c0_18, %c0_19] : memref<1x128xf32, #tpu.memory_space<vmem>>, vector<1x128xf32>
    tpu.vector_store %arg6[%c0_18, %c0_19], %29 {strides = array<i32>} : memref<1x128xf32, #tpu.memory_space<vmem>>, vector<1x128xf32>,
    %c0_20 = arith.constant 0 : index
    %c0_21 = arith.constant 0 : index
    %31 = vector.load %arg7[%c0_20, %c0_21] : memref<1x128xf32, #tpu.memory_space<vmem>>, vector<1x128xf32>
    %32 = arith.mulf %25, %25 : vector<8x128xf32>
    %cst_22 = arith.constant dense<0.000000e+00> : vector<128xf32>
    %33 = vector.multi_reduction <add>, %32, %cst_22 [0] : vector<8x128xf32> to vector<128xf32>
    %34 = vector.shape_cast %33 : vector<128xf32> to vector<1x128xf32>
    %35 = arith.addf %31, %34 : vector<1x128xf32>
    %c0_23 = arith.constant 0 : index
    %c0_24 = arith.constant 0 : index
    %36 = vector.load %arg7[%c0_23, %c0_24] : memref<1x128xf32, #tpu.memory_space<vmem>>, vector<1x128xf32>
    tpu.vector_store %arg7[%c0_23, %c0_24], %35 {strides = array<i32>} : memref<1x128xf32, #tpu.memory_space<vmem>>, vector<1x128xf32>,
    return
  }
  func.func @transform_0(%arg0: i32) -> (i32, i32) {
    %c0_i32 = arith.constant 0 : i32
    %c0_i32_0 = arith.constant 0 : i32
    return %arg0, %c0_i32 : i32, i32
  }
  func.func @transform_1(%arg0: i32) -> (i32, i32) {
    %c0_i32 = arith.constant 0 : i32
    %c0_i32_0 = arith.constant 0 : i32
    %c0_i32_1 = arith.constant 0 : i32
    return %c0_i32, %c0_i32_0 : i32, i32
  }
  func.func @transform_2(%arg0: i32) -> (i32, i32) {
    %c0_i32 = arith.constant 0 : i32
    %c0_i32_0 = arith.constant 0 : i32
    %c0_i32_1 = arith.constant 0 : i32
    return %c0_i32, %c0_i32_0 : i32, i32
  }
  func.func @transform_3(%arg0: i32) -> (i32, i32) {
    %c0_i32 = arith.constant 0 : i32
    %c0_i32_0 = arith.constant 0 : i32
    %c0_i32_1 = arith.constant 0 : i32
    return %c0_i32, %c0_i32_0 : i32, i32
  }
  func.func @transform_4(%arg0: i32) -> (i32, i32) {
    %c0_i32 = arith.constant 0 : i32
    %c0_i32_0 = arith.constant 0 : i32
    return %arg0, %c0_i32 : i32, i32
  }
  func.func @transform_5(%arg0: i32) -> (i32, i32) {
    %c0_i32 = arith.constant 0 : i32
    %c0_i32_0 = arith.constant 0 : i32
    %c0_i32_1 = arith.constant 0 : i32
    return %c0_i32, %c0_i32_0 : i32, i32
  }
  func.func @transform_6(%arg0: i32) -> (i32, i32) {
    %c0_i32 = arith.constant 0 : i32
    %c0_i32_0 = arith.constant 0 : i32
    %c0_i32_1 = arith.constant 0 : i32
    return %c0_i32, %c0_i32_0 : i32, i32
  }
}

</mosaic_0001>

<llo_original>
// kernel: tpu_custom_call.1
$region0: #{tpu_custom_call.1}
  #allocation0 [shape = 'u32[]', space=smem, size = 0x4, offset = 0x4, fixed_abs, tag = 'smem constant byte address 0x4 - core index']
  #allocation1 [shape = 'u32[144,128]{1,0:T(1,128)}', space=vmem, size = 0x12000, scoped, tag = 'internal scratch']
  %s0 = inlined_call_operand.hbm [shape: f32[8,128], index: 0, kind: input, shape index: {}]
  %s1 = inlined_call_operand.hbm [shape: f32[128,128], index: 1, kind: input, shape index: {}]
  %s2 = inlined_call_operand.vmem [shape: f32[1,128], index: 2, kind: input, shape index: {}]
  %s3 = inlined_call_operand.hbm [shape: f32[128,128], index: 3, kind: input, shape index: {}]
  %s4 = inlined_call_operand.hbm [shape: f32[8,128], index: 4, kind: output, shape index: {0}]
  %s5 = inlined_call_operand.hbm [shape: f32[1,128], index: 5, kind: output, shape index: {1}]
  %s6 = inlined_call_operand.hbm [shape: f32[1,128], index: 6, kind: output, shape index: {2}]
  %7 = xla_tuple %s4, %s5, %s6
  %s8 = sld [smem:[#allocation0]]
  $region58: #{tpu_custom_call.1} parent=0
    _
  %s10 = ssub.s32 1, %s8
  %s11 = scalar_select 0, %s10, %s8
  $region1: #{tpu_custom_call.1} parent=0
    #allocation2 [shape = 'u8[4096]{0}', space=vmem, size = 0x1000, scoped, tag = 'input window, operand 0, single buffered']
    #allocation3 [shape = 's32[1]{0}', space=sflag, size = 0x4, scoped, tag = 'scoped memory for tpu_custom_call.1']
    #allocation4 [shape = 's32[1]{0}', space=sflag, size = 0x4, scoped, tag = 'scoped memory for tpu_custom_call.1']
    #allocation5 [shape = 'u8[65536]{0}', space=vmem, size = 0x10000, scoped, tag = 'input window, operand 1, single buffered']
    #allocation6 [shape = 's32[1]{0}', space=sflag, size = 0x4, scoped, tag = 'scoped memory for tpu_custom_call.1']
    #allocation7 [shape = 'u8[65536]{0}', space=vmem, size = 0x10000, scoped, tag = 'input window, operand 3, single buffered']
    #allocation8 [shape = 'u8[4096]{0}', space=vmem, size = 0x1000, scoped, tag = 'output window, operand 0, single buffered']
    #allocation9 [shape = 'u8[512]{0}', space=vmem, size = 0x400, scoped, tag = 'output window, operand 1, single buffered']
    #allocation10 [shape = 's32[1]{0}', space=sflag, size = 0x4, scoped, tag = 'scoped memory for tpu_custom_call.1']
    #allocation11 [shape = 'u8[512]{0}', space=vmem, size = 0x400, scoped, tag = 'output window, operand 2, single buffered']
    %12 = vsyncpa [#allocation3], 0
    %13 = vsyncpa [#allocation6], 0
    %14 = vsyncpa [#allocation4], 0
    %15 = vsyncpa [#allocation10], 0
    // Predicated region
    $region2: #{tpu_custom_call.1} parent=1 // pred_check
      _
    $region3: #{tpu_custom_call.1} parent=1 // pred_check_branch
      %17 = sbr.rel (0) target = $region5
    $region4: #{tpu_custom_call.1} parent=1 // pred_region
      %s19 = ssub.s32 128, 128
      %20 = vsyncadd [#allocation3], %s19
      %s22 = sshll.u32 [#allocation2], 4
      %s23 = int_to_ptr.vmem [resolvable:$true] %s22
      %25 = dma.hbm_to_vmem [thread:$0]  %s0, 128, %s23, [#allocation3]
    $region5: #{tpu_custom_call.1} parent=1 // pred_fallthru
      _
    // Predicated region
    $region6: #{tpu_custom_call.1} parent=1 // pred_check
      _
    $region7: #{tpu_custom_call.1} parent=1 // pred_check_branch
      %27 = sbr.rel (0) target = $region9
    $region8: #{tpu_custom_call.1} parent=1 // pred_region
      %s29 = ssub.s32 2048, 2048
      %30 = vsyncadd [#allocation6], %s29
      %s31 = sshll.u32 [#allocation5], 4
      %s32 = int_to_ptr.vmem [resolvable:$true] %s31
      %37 = dma.hbm_to_vmem [thread:$0]  %s1, 2048, %s32, [#allocation6], 128, 128, 8
    $region9: #{tpu_custom_call.1} parent=1 // pred_fallthru
      _
    // Predicated region
    $region10: #{tpu_custom_call.1} parent=1 // pred_check
      _
    $region11: #{tpu_custom_call.1} parent=1 // pred_check_branch
      %39 = sbr.rel (0) target = $region13
    $region12: #{tpu_custom_call.1} parent=1 // pred_region
      _
    $region13: #{tpu_custom_call.1} parent=1 // pred_fallthru
      _
    // Predicated region
    $region14: #{tpu_custom_call.1} parent=1 // pred_check
      _
    $region15: #{tpu_custom_call.1} parent=1 // pred_check_branch
      %41 = sbr.rel (0) target = $region17
    $region16: #{tpu_custom_call.1} parent=1 // pred_region
      %s43 = ssub.s32 2048, 2048
      %44 = vsyncadd [#allocation6], %s43
      %s45 = sshll.u32 [#allocation7], 4
      %s46 = int_to_ptr.vmem [resolvable:$true] %s45
      %51 = dma.hbm_to_vmem [thread:$0]  %s3, 2048, %s46, [#allocation6], 128, 128, 8
    $region17: #{tpu_custom_call.1} parent=1 // pred_fallthru
      _
    // Predicated region
    $region18: #{tpu_custom_call.1} parent=1 // pred_check
      _
    $region19: #{tpu_custom_call.1} parent=1 // pred_check_branch
      %53 = sbr.rel (0) target = $region21
    $region20: #{tpu_custom_call.1} parent=1 // pred_region
      %54 = dma.done [#allocation3], 128
    $region21: #{tpu_custom_call.1} parent=1 // pred_fallthru
      _
    // Predicated region
    $region22: #{tpu_custom_call.1} parent=1 // pred_check
      _
    $region23: #{tpu_custom_call.1} parent=1 // pred_check_branch
      %56 = sbr.rel (0) target = $region25
    $region24: #{tpu_custom_call.1} parent=1 // pred_region
      %57 = dma.done [#allocation6], 2048
    $region25: #{tpu_custom_call.1} parent=1 // pred_fallthru
      _
    // Predicated region
    $region26: #{tpu_custom_call.1} parent=1 // pred_check
      _
    $region27: #{tpu_custom_call.1} parent=1 // pred_check_branch
      %59 = sbr.rel (0) target = $region29
    $region28: #{tpu_custom_call.1} parent=1 // pred_region
      %60 = dma.done [#allocation6], 2048
    $region29: #{tpu_custom_call.1} parent=1 // pred_fallthru
      _
    %p61 = scmp.eq.s32.totalorder 0, 0
    // Predicated region
    $region30: #{tpu_custom_call.1} parent=1 // pred_check
      %p62 = pneg %p61
    $region31: #{tpu_custom_call.1} parent=1 // pred_check_branch
      %64 = sbr.rel (%p62) target = $region33
    $region32: #{tpu_custom_call.1} parent=1 // pred_region
      %65 = vst [vmem:[#allocation9] sm:$0x1] 0.0
      %66 = vst [vmem:[#allocation11] sm:$0x1] 0.0
    $region33: #{tpu_custom_call.1} parent=1 // pred_fallthru
      _
    %v67 = vld [vmem:[#allocation2] sm:$0xff]
    %v68 = vld [vmem:[#allocation5] sm:$0xff]
    %v69 = vld [vmem:[#allocation5 + $0x8] sm:$0xff]
    %v70 = vld [vmem:[#allocation5 + $0x10] sm:$0xff]
    %v71 = vld [vmem:[#allocation5 + $0x18] sm:$0xff]
    %v72 = vld [vmem:[#allocation5 + $0x20] sm:$0xff]
    %v73 = vld [vmem:[#allocation5 + $0x28] sm:$0xff]
    %v74 = vld [vmem:[#allocation5 + $0x30] sm:$0xff]
    %v75 = vld [vmem:[#allocation5 + $0x38] sm:$0xff]
    %v76 = vld [vmem:[#allocation5 + $0x40] sm:$0xff]
    %v77 = vld [vmem:[#allocation5 + $0x48] sm:$0xff]
    %v78 = vld [vmem:[#allocation5 + $0x50] sm:$0xff]
    %v79 = vld [vmem:[#allocation5 + $0x58] sm:$0xff]
    %v80 = vld [vmem:[#allocation5 + $0x60] sm:$0xff]
    %v81 = vld [vmem:[#allocation5 + $0x68] sm:$0xff]
    %v82 = vld [vmem:[#allocation5 + $0x70] sm:$0xff]
    %v83 = vld [vmem:[#allocation5 + $0x78] sm:$0xff]
    %v84 = vld [vmem:[%s2] sm:$0x1]
    %v86 = vlaneseq
    %v87 = vshrl.u32 %v86, 7
    %v88 = vsub.s32 0, %v87
    %v89 = vrot.slane %v84, %v88
    %91 = vmatprep.subr.mxu0 0.0
    %92 = vmatpush1.msra.mxu0 %v68
    %93 = vmatprep.subr.mxu0 0.0
    %94 = vmatpush1.msra.mxu0 %v69
    %95 = vmatprep.subr.mxu0 0.0
    %96 = vmatpush1.msra.mxu0 %v70
    %97 = vmatprep.subr.mxu0 0.0
    %98 = vmatpush1.msra.mxu0 %v71
    %99 = vmatprep.subr.mxu0 0.0
    %100 = vmatpush1.msra.mxu0 %v72
    %101 = vmatprep.subr.mxu0 0.0
    %102 = vmatpush1.msra.mxu0 %v73
    %103 = vmatprep.subr.mxu0 0.0
    %104 = vmatpush1.msra.mxu0 %v74
    %105 = vmatprep.subr.mxu0 0.0
    %106 = vmatpush1.msra.mxu0 %v75
    %107 = vmatprep.subr.mxu0 0.0
    %108 = vmatpush1.msra.mxu0 %v76
    %109 = vmatprep.subr.mxu0 0.0
    %110 = vmatpush1.msra.mxu0 %v77
    %111 = vmatprep.subr.mxu0 0.0
    %112 = vmatpush1.msra.mxu0 %v78
    %113 = vmatprep.subr.mxu0 0.0
    %114 = vmatpush1.msra.mxu0 %v79
    %115 = vmatprep.subr.mxu0 0.0
    %116 = vmatpush1.msra.mxu0 %v80
    %117 = vmatprep.subr.mxu0 0.0
    %118 = vmatpush1.msra.mxu0 %v81
    %119 = vmatprep.subr.mxu0 0.0
    %120 = vmatpush1.msra.mxu0 %v82
    %121 = vmatprep.subr.mxu0 0.0
    %122 = vmatpush1.msra.mxu0 %v83
    %123 = vmatprep.subr.mxu0 0.0
    %124 = vmatpush1.msra.mxu0 0.0
    %125 = vmatprep.subr.mxu0 0.0
    %126 = vmatpush1.msra.mxu0 0.0
    %127 = vmatprep.subr.mxu0 0.0
    %128 = vmatpush1.msra.mxu0 0.0
    %129 = vmatprep.subr.mxu0 0.0
    %130 = vmatpush1.msra.mxu0 0.0
    %131 = vmatprep.subr.mxu0 0.0
    %132 = vmatpush1.msra.mxu0 0.0
    %133 = vmatprep.subr.mxu0 0.0
    %134 = vmatpush1.msra.mxu0 0.0
    %135 = vmatprep.subr.mxu0 0.0
    %136 = vmatpush1.msra.mxu0 0.0
    %137 = vmatprep.subr.mxu0 0.0
    %138 = vmatpush1.msra.mxu0 0.0
    %139 = vmatprep.subr.mxu0 0.0
    %140 = vmatpush1.msra.mxu0 0.0
    %141 = vmatprep.subr.mxu0 0.0
    %142 = vmatpush1.msra.mxu0 0.0
    %143 = vmatprep.subr.mxu0 0.0
    %144 = vmatpush1.msra.mxu0 0.0
    %145 = vmatprep.subr.mxu0 0.0
    %146 = vmatpush1.msra.mxu0 0.0
    %147 = vmatprep.subr.mxu0 0.0
    %148 = vmatpush1.msra.mxu0 0.0
    %149 = vmatprep.subr.mxu0 0.0
    %150 = vmatpush1.msra.mxu0 0.0
    %151 = vmatprep.subr.mxu0 0.0
    %152 = vmatpush1.msra.mxu0 0.0
    %153 = vmatprep.subr.mxu0 0.0
    %154 = vmatpush1.msra.mxu0 0.0
    %155 = vmatprep.mubr.f32.mxu0 0.0
    %156 = vmatmul.mubr.f32.gmra.mrb[0].mxu0 %v67
    %v157 = vpop.f32.mrb[0].mxu0
    %v158 = vadd.f32 %v89, %v157
    %v159 = vpop.f32.mrb[0].mxu0
    %160 = vdwg.mxu0
    %v161 = vmax.f32 %v158, 0.0
    %v162 = vmin.f32 %v161, 6.0
    %v163 = vld [vmem:[#allocation7] sm:$0xff]
    %v164 = vld [vmem:[#allocation7 + $0x8] sm:$0xff]
    %v165 = vld [vmem:[#allocation7 + $0x10] sm:$0xff]
    %v166 = vld [vmem:[#allocation7 + $0x18] sm:$0xff]
    %v167 = vld [vmem:[#allocation7 + $0x20] sm:$0xff]
    %v168 = vld [vmem:[#allocation7 + $0x28] sm:$0xff]
    %v169 = vld [vmem:[#allocation7 + $0x30] sm:$0xff]
    %v170 = vld [vmem:[#allocation7 + $0x38] sm:$0xff]
    %v171 = vld [vmem:[#allocation7 + $0x40] sm:$0xff]
    %v172 = vld [vmem:[#allocation7 + $0x48] sm:$0xff]
    %v173 = vld [vmem:[#allocation7 + $0x50] sm:$0xff]
    %v174 = vld [vmem:[#allocation7 + $0x58] sm:$0xff]
    %v175 = vld [vmem:[#allocation7 + $0x60] sm:$0xff]
    %v176 = vld [vmem:[#allocation7 + $0x68] sm:$0xff]
    %v177 = vld [vmem:[#allocation7 + $0x70] sm:$0xff]
    %v178 = vld [vmem:[#allocation7 + $0x78] sm:$0xff]
    %179 = vmatprep.subr.mxu0 0.0
    %180 = vmatpush1.msra.mxu0 %v163
    %181 = vmatprep.subr.mxu0 0.0
    %182 = vmatpush1.msra.mxu0 %v164
    %183 = vmatprep.subr.mxu0 0.0
    %184 = vmatpush1.msra.mxu0 %v165
    %185 = vmatprep.subr.mxu0 0.0
    %186 = vmatpush1.msra.mxu0 %v166
    %187 = vmatprep.subr.mxu0 0.0
    %188 = vmatpush1.msra.mxu0 %v167
    %189 = vmatprep.subr.mxu0 0.0
    %190 = vmatpush1.msra.mxu0 %v168
    %191 = vmatprep.subr.mxu0 0.0
    %192 = vmatpush1.msra.mxu0 %v169
    %193 = vmatprep.subr.mxu0 0.0
    %194 = vmatpush1.msra.mxu0 %v170
    %195 = vmatprep.subr.mxu0 0.0
    %196 = vmatpush1.msra.mxu0 %v171
    %197 = vmatprep.subr.mxu0 0.0
    %198 = vmatpush1.msra.mxu0 %v172
    %199 = vmatprep.subr.mxu0 0.0
    %200 = vmatpush1.msra.mxu0 %v173
    %201 = vmatprep.subr.mxu0 0.0
    %202 = vmatpush1.msra.mxu0 %v174
    %203 = vmatprep.subr.mxu0 0.0
    %204 = vmatpush1.msra.mxu0 %v175
    %205 = vmatprep.subr.mxu0 0.0
    %206 = vmatpush1.msra.mxu0 %v176
    %207 = vmatprep.subr.mxu0 0.0
    %208 = vmatpush1.msra.mxu0 %v177
    %209 = vmatprep.subr.mxu0 0.0
    %210 = vmatpush1.msra.mxu0 %v178
    %211 = vmatprep.subr.mxu0 0.0
    %212 = vmatpush1.msra.mxu0 0.0
    %213 = vmatprep.subr.mxu0 0.0
    %214 = vmatpush1.msra.mxu0 0.0
    %215 = vmatprep.subr.mxu0 0.0
    %216 = vmatpush1.msra.mxu0 0.0
    %217 = vmatprep.subr.mxu0 0.0
    %218 = vmatpush1.msra.mxu0 0.0
    %219 = vmatprep.subr.mxu0 0.0
    %220 = vmatpush1.msra.mxu0 0.0
    %221 = vmatprep.subr.mxu0 0.0
    %222 = vmatpush1.msra.mxu0 0.0
    %223 = vmatprep.subr.mxu0 0.0
    %224 = vmatpush1.msra.mxu0 0.0
    %225 = vmatprep.subr.mxu0 0.0
    %226 = vmatpush1.msra.mxu0 0.0
    %227 = vmatprep.subr.mxu0 0.0
    %228 = vmatpush1.msra.mxu0 0.0
    %229 = vmatprep.subr.mxu0 0.0
    %230 = vmatpush1.msra.mxu0 0.0
    %231 = vmatprep.subr.mxu0 0.0
    %232 = vmatpush1.msra.mxu0 0.0
    %233 = vmatprep.subr.mxu0 0.0
    %234 = vmatpush1.msra.mxu0 0.0
    %235 = vmatprep.subr.mxu0 0.0
    %236 = vmatpush1.msra.mxu0 0.0
    %237 = vmatprep.subr.mxu0 0.0
    %238 = vmatpush1.msra.mxu0 0.0
    %239 = vmatprep.subr.mxu0 0.0
    %240 = vmatpush1.msra.mxu0 0.0
    %241 = vmatprep.subr.mxu0 0.0
    %242 = vmatpush1.msra.mxu0 0.0
    %243 = vmatprep.mubr.f32.mxu0 0.0
    %244 = vmatmul.mubr.f32.gmra.mrb[0].mxu0 %v162
    %v245 = vpop.f32.mrb[0].mxu0
    %v246 = vadd.f32 0.0, %v245
    %v247 = vpop.f32.mrb[0].mxu0
    %248 = vdwg.mxu0
    %249 = vst [vmem:[#allocation8] sm:$0xff] %v246
    %s250 = smul.u32 0, 8
    %v251 = vlaneseq
    %v252 = vshrl.u32 %v251, 7
    %v253 = vstv %s250
    %v254 = vadd.s32 %v253, %v252
    %vm255 = vcmp.lt.s32.totalorder %v254, 8
    %v256 = vsel %vm255, 1, 0
    %vm257 = vcmp.eq.s32.totalorder %v256, 1
    %v258 = vsel %vm257, %v246, 0.0
    %v259 = vld [vmem:[#allocation9] sm:$0x1]
    %v260 = vrot.slane %v258, 4
    %v261 = vadd.f32 %v258, %v260
    %v262 = vrot.slane %v261, 2
    %v263 = vadd.f32 %v261, %v262
    %v264 = vrot.slane %v263, 1
    %v265 = vadd.f32 %v263, %v264
    %v266 = vadd.f32 %v259, %v265
    %267 = vst [vmem:[#allocation9] sm:$0x1] %v266
    %v268 = vld [vmem:[#allocation11] sm:$0x1]
    %v269 = vmul.f32 %v258, %v258
    %v270 = vrot.slane %v269, 4
    %v271 = vadd.f32 %v269, %v270
    %v272 = vrot.slane %v271, 2
    %v273 = vadd.f32 %v271, %v272
    %v274 = vrot.slane %v273, 1
    %v275 = vadd.f32 %v273, %v274
    %v276 = vadd.f32 %v268, %v275
    %277 = vst [vmem:[#allocation11] sm:$0x1] %v276
    // Predicated region
    $region34: #{tpu_custom_call.1} parent=1 // pred_check
      _
    $region35: #{tpu_custom_call.1} parent=1 // pred_check_branch
      %279 = sbr.rel (0) target = $region37
    $region36: #{tpu_custom_call.1} parent=1 // pred_region
      %s281 = ssub.s32 128, 128
      %282 = vsyncadd [#allocation4], %s281
      %s284 = sshll.u32 [#allocation8], 4
      %s285 = int_to_ptr.vmem [resolvable:$true] %s284
      %287 = dma.vmem_to_hbm [thread:$0]  %s285, 128, %s4, [#allocation4]
    $region37: #{tpu_custom_call.1} parent=1 // pred_fallthru
      _
    // Predicated region
    $region38: #{tpu_custom_call.1} parent=1 // pred_check
      _
    $region39: #{tpu_custom_call.1} parent=1 // pred_check_branch
      %289 = sbr.rel (0) target = $region41
    $region40: #{tpu_custom_call.1} parent=1 // pred_region
      %s291 = ssub.s32 16, 16
      %292 = vsyncadd [#allocation10], %s291
      %s294 = sshll.u32 [#allocation9], 4
      %s295 = int_to_ptr.vmem [resolvable:$true] %s294
      %297 = dma.vmem_to_hbm [thread:$0]  %s295, 16, %s5, [#allocation10]
    $region41: #{tpu_custom_call.1} parent=1 // pred_fallthru
      _
    // Predicated region
    $region42: #{tpu_custom_call.1} parent=1 // pred_check
      _
    $region43: #{tpu_custom_call.1} parent=1 // pred_check_branch
      %299 = sbr.rel (0) target = $region45
    $region44: #{tpu_custom_call.1} parent=1 // pred_region
      %s301 = ssub.s32 16, 16
      %302 = vsyncadd [#allocation10], %s301
      %s304 = sshll.u32 [#allocation11], 4
      %s305 = int_to_ptr.vmem [resolvable:$true] %s304
      %307 = dma.vmem_to_hbm [thread:$0]  %s305, 16, %s6, [#allocation10]
    $region45: #{tpu_custom_call.1} parent=1 // pred_fallthru
      _
    // Predicated region
    $region46: #{tpu_custom_call.1} parent=1 // pred_check
      _
    $region47: #{tpu_custom_call.1} parent=1 // pred_check_branch
      %309 = sbr.rel (0) target = $region49
    $region48: #{tpu_custom_call.1} parent=1 // pred_region
      %310 = dma.done [#allocation4], 128
    $region49: #{tpu_custom_call.1} parent=1 // pred_fallthru
      _
    // Predicated region
    $region50: #{tpu_custom_call.1} parent=1 // pred_check
      _
    $region51: #{tpu_custom_call.1} parent=1 // pred_check_branch
      %312 = sbr.rel (0) target = $region53
    $region52: #{tpu_custom_call.1} parent=1 // pred_region
      %313 = dma.done [#allocation10], 16
    $region53: #{tpu_custom_call.1} parent=1 // pred_fallthru
      _
    // Predicated region
    $region54: #{tpu_custom_call.1} parent=1 // pred_check
      _
    $region55: #{tpu_custom_call.1} parent=1 // pred_check_branch
      %315 = sbr.rel (0) target = $region57
    $region56: #{tpu_custom_call.1} parent=1 // pred_region
      %316 = dma.done [#allocation10], 16
    $region57: #{tpu_custom_call.1} parent=1 // pred_fallthru
      _
    %317 = vsyncpa [#allocation3], 1
    %318 = vsyncpa [#allocation6], 1
    %319 = vsyncpa [#allocation4], 1
    %320 = vsyncpa [#allocation10], 1

</llo_original>
